<compile_context>
chip_gen: v6e
topology: v6e:2x2x1
jax: 0.10.0
libtpu: 0.0.40
codegen_flags: <defaults>
</compile_context>

<pallas_src>
import math

import jax
import jax.numpy as jnp
from jax.experimental import pallas as pl
from jax.experimental.pallas import tpu as pltpu


def _ss_linear_kernel(x_ref, w_ref, b_ref, o_ref):
    # x_ref: (TM, Kp), w_ref: (Kp, Np), b_ref: (1, Np), o_ref: (TM, Np)
    acc = jnp.dot(x_ref[...], w_ref[...], preferred_element_type=jnp.float32)
    o_ref[...] = (acc + b_ref[...]).astype(o_ref.dtype)


def _pack_factor(ss_dim, c_z, lanes=128):
    """Smallest r such that r*ss_dim and r*c_z are both multiples of `lanes`."""
    r_in = lanes // math.gcd(lanes, ss_dim)
    r_out = lanes // math.gcd(lanes, c_z)
    return (r_in * r_out) // math.gcd(r_in, r_out)


def ss_embedder_forward(ss, weight, bias, *, vmem_budget_bytes=12 * 1024 * 1024):
    """ss: [..., N_res, N_res, ss_dim] -> [..., N_res, N_res, c_z]

    weight: [ss_dim, c_z]  (transposed vs. torch's [c_z, ss_dim])
    bias:   [c_z]
    """
    ss_dim, c_z = weight.shape
    lead_shape = ss.shape[:-1]
    M = 1
    for d in lead_shape:
        M *= d
    x = ss.reshape(M, ss_dim)

    # ---- lane-dense repack (free reshapes; block-diagonal replicated weight) ----
    r = _pack_factor(ss_dim, c_z)
    use_pack = (r > 1) and (M % r == 0)
    if use_pack:
        Kp, Np = r * ss_dim, r * c_z
        Mp = M // r
        x_p = x.reshape(Mp, Kp)  # contiguous row-major -> no data movement
        eye = jnp.eye(r, dtype=weight.dtype)
        # W_p[(i*ss_dim+k), (j*c_z+n)] = eye[i, j] * W[k, n]  (block diagonal)
        w_p = jnp.einsum("ij,kn->ikjn", eye, weight).reshape(Kp, Np)
        b_p = jnp.tile(bias, (r,)).reshape(1, Np)
    else:
        Kp, Np = ss_dim, c_z
        Mp = M
        x_p = x
        w_p = weight
        b_p = bias.reshape(1, c_z)

    # ---- tile sizing from a VMEM budget (safe on v5e's 16 MiB default limit) ----
    ebytes = jnp.dtype(x_p.dtype).itemsize
    row_bytes = (Kp + Np) * ebytes * 2  # double-buffered input + output blocks
    w_bytes = Kp * Np * jnp.dtype(w_p.dtype).itemsize * 2
    tm = (vmem_budget_bytes - w_bytes) // max(row_bytes, 1)
    tm = max(8, min(int(tm), 1024))
    tm = (tm // 8) * 8
    if Mp <= tm:
        tm = Mp  # single block equal to the full (small) array extent

    grid = (pl.cdiv(Mp, tm),)
    out = pl.pallas_call(
        _ss_linear_kernel,
        out_shape=jax.ShapeDtypeStruct((Mp, Np), ss.dtype),
        grid_spec=pltpu.PrefetchScalarGridSpec(
            num_scalar_prefetch=0,
            grid=grid,
            in_specs=[
                pl.BlockSpec((tm, Kp), lambda i: (i, 0)),
                pl.BlockSpec((Kp, Np), lambda i: (0, 0)),  # VMEM-resident weight
                pl.BlockSpec((1, Np), lambda i: (0, 0)),   # VMEM-resident bias
            ],
            out_specs=pl.BlockSpec((tm, Np), lambda i: (i, 0)),
        ),
        compiler_params=pltpu.CompilerParams(
            # 1-D M axis is parallel -> shards across both TensorCores on v7x.
            dimension_semantics=("parallel",),
        ),
    )(x_p, w_p, b_p)

    # (Mp, r*c_z) row-major is bit-identical to (M, c_z) row-major.
    return out.reshape(*lead_shape, c_z)


if __name__ == "__main__":
    # Small shapes consistent with the module's forward:
    #   ss: [batch, N_res, N_res, ss_dim] -> [batch, N_res, N_res, c_z]
    batch, n_res, ss_dim, c_z = 2, 8, 8, 32

    key = jax.random.PRNGKey(0)
    k_ss, k_w, k_b = jax.random.split(key, 3)

    ss = jax.random.normal(k_ss, (batch, n_res, n_res, ss_dim), dtype=jnp.float32)

    # Deterministic parameter init (synthetic; shapes from nn.Linear(ss_dim, c_z)).
    # Stored as [ss_dim, c_z] so the kernel computes x @ W + b directly.
    bound = 1.0 / (ss_dim ** 0.5)
    weight = jax.random.uniform(k_w, (ss_dim, c_z), jnp.float32, -bound, bound)
    bias = jax.random.uniform(k_b, (c_z,), jnp.float32, -bound, bound)

    out = ss_embedder_forward(ss, weight, bias)
    out = jax.block_until_ready(out)

    # Reference check in plain JAX (same math as torch's Linear).
    ref = ss @ weight + bias
    assert out.shape == (batch, n_res, n_res, c_z)
    assert jnp.allclose(out, ref, atol=1e-5, rtol=1e-5)

    print("KERNEL_OK")
</pallas_src>

<mosaic_0001>
module attributes {stable_mosaic.version = 11 : i64} {
  func.func @_ss_linear_kernel(%arg0: i32, %arg1: memref<8x128xf32, #tpu.memory_space<vmem>>, %arg2: memref<128x512xf32, #tpu.memory_space<vmem>>, %arg3: memref<1x512xf32, #tpu.memory_space<vmem>>, %arg4: memref<8x512xf32, #tpu.memory_space<vmem>>) attributes {dimension_semantics = [#tpu.dimension_semantics<parallel>], iteration_bounds = array<i64: 1>, scalar_prefetch = 0 : i64, scratch_operands = 0 : i64, tpu.core_type = #tpu.core_type<tc>, window_params = [{transform_indices = @transform_0, window_bounds = array<i64: 8, 128>}, {pipeline_mode = #tpu.pipeline_mode<synchronous>, transform_indices = @transform_1, window_bounds = array<i64: 128, 512>}, {pipeline_mode = #tpu.pipeline_mode<synchronous>, transform_indices = @transform_2, window_bounds = array<i64: 1, 512>}, {transform_indices = @transform_3, window_bounds = array<i64: 8, 512>}]} {
    %c0 = arith.constant 0 : index
    %c0_0 = arith.constant 0 : index
    %0 = vector.load %arg1[%c0, %c0_0] : memref<8x128xf32, #tpu.memory_space<vmem>>, vector<8x128xf32>
    %c0_1 = arith.constant 0 : index
    %c0_2 = arith.constant 0 : index
    %1 = vector.load %arg2[%c0_1, %c0_2] : memref<128x512xf32, #tpu.memory_space<vmem>>, vector<128x512xf32>
    %cst = arith.constant dense<0.000000e+00> : vector<8x512xf32>
    %2 = tpu.matmul %0, %1, %cst {dimension_numbers = #tpu.dot_dimension_numbers<[1], [0], [0], [1], [0, 0, 1, 1], [], []>} : vector<8x128xf32>, vector<128x512xf32>, vector<8x512xf32> -> vector<8x512xf32>
    %c0_3 = arith.constant 0 : index
    %c0_4 = arith.constant 0 : index
    %3 = vector.load %arg3[%c0_3, %c0_4] : memref<1x512xf32, #tpu.memory_space<vmem>>, vector<1x512xf32>
    %4 = vector.broadcast %3 : vector<1x512xf32> to vector<8x512xf32>
    %5 = arith.addf %2, %4 : vector<8x512xf32>
    %c0_5 = arith.constant 0 : index
    %c0_6 = arith.constant 0 : index
    %6 = vector.load %arg4[%c0_5, %c0_6] : memref<8x512xf32, #tpu.memory_space<vmem>>, vector<8x512xf32>
    tpu.vector_store %arg4[%c0_5, %c0_6], %5 {strides = array<i32>} : memref<8x512xf32, #tpu.memory_space<vmem>>, vector<8x512xf32>,
    return
  }
  func.func @transform_0(%arg0: i32) -> (i32, i32) {
    %c0_i32 = arith.constant 0 : i32
    %c0_i32_0 = arith.constant 0 : i32
    return %arg0, %c0_i32 : i32, i32
  }
  func.func @transform_1(%arg0: i32) -> (i32, i32) {
    %c0_i32 = arith.constant 0 : i32
    %c0_i32_0 = arith.constant 0 : i32
    %c0_i32_1 = arith.constant 0 : i32
    return %c0_i32, %c0_i32_0 : i32, i32
  }
  func.func @transform_2(%arg0: i32) -> (i32, i32) {
    %c0_i32 = arith.constant 0 : i32
    %c0_i32_0 = arith.constant 0 : i32
    %c0_i32_1 = arith.constant 0 : i32
    return %c0_i32, %c0_i32_0 : i32, i32
  }
  func.func @transform_3(%arg0: i32) -> (i32, i32) {
    %c0_i32 = arith.constant 0 : i32
    %c0_i32_0 = arith.constant 0 : i32
    return %arg0, %c0_i32 : i32, i32
  }
}

</mosaic_0001>

<llo_original>
// kernel: tpu_custom_call.1
$region0: #{tpu_custom_call.1}
  #allocation0 [shape = 'u32[]', space=smem, size = 0x4, offset = 0x4, fixed_abs, tag = 'smem constant byte address 0x4 - core index']
  #allocation1 [shape = 'u32[144,128]{1,0:T(1,128)}', space=vmem, size = 0x12000, scoped, tag = 'internal scratch']
  %s0 = inlined_call_operand.hbm [shape: f32[8,128], index: 0, kind: input, shape index: {}]
  %s1 = inlined_call_operand.hbm [shape: f32[128,512], index: 1, kind: input, shape index: {}]
  %s2 = inlined_call_operand.hbm [shape: f32[1,512], index: 2, kind: input, shape index: {}]
  %s3 = inlined_call_operand.hbm [shape: f32[8,512], index: 3, kind: output, shape index: {}]
  %s4 = sld [smem:[#allocation0]]
  $region34: #{tpu_custom_call.1} parent=0
    _
  %s6 = ssub.s32 1, %s4
  %s7 = scalar_select 0, %s6, %s4
  $region1: #{tpu_custom_call.1} parent=0
    #allocation2 [shape = 'u8[4096]{0}', space=vmem, size = 0x1000, scoped, tag = 'input window, operand 0, single buffered']
    #allocation3 [shape = 's32[1]{0}', space=sflag, size = 0x4, scoped, tag = 'scoped memory for tpu_custom_call.1']
    #allocation4 [shape = 's32[1]{0}', space=sflag, size = 0x4, scoped, tag = 'scoped memory for tpu_custom_call.1']
    #allocation5 [shape = 'u8[262144]{0}', space=vmem, size = 0x40000, scoped, tag = 'input window, operand 1, single buffered']
    #allocation6 [shape = 's32[1]{0}', space=sflag, size = 0x4, scoped, tag = 'scoped memory for tpu_custom_call.1']
    #allocation7 [shape = 'u8[2048]{0}', space=vmem, size = 0x800, scoped, tag = 'input window, operand 2, single buffered']
    #allocation8 [shape = 'u8[16384]{0}', space=vmem, size = 0x4000, scoped, tag = 'output window, operand 0, single buffered']
    %8 = vsyncpa [#allocation3], 0
    %9 = vsyncpa [#allocation6], 0
    %10 = vsyncpa [#allocation4], 0
    // Predicated region
    $region2: #{tpu_custom_call.1} parent=1 // pred_check
      _
    $region3: #{tpu_custom_call.1} parent=1 // pred_check_branch
      %12 = sbr.rel (0) target = $region5
    $region4: #{tpu_custom_call.1} parent=1 // pred_region
      %s14 = ssub.s32 128, 128
      %15 = vsyncadd [#allocation3], %s14
      %s17 = sshll.u32 [#allocation2], 4
      %s18 = int_to_ptr.vmem [resolvable:$true] %s17
      %20 = dma.hbm_to_vmem [thread:$0]  %s0, 128, %s18, [#allocation3]
    $region5: #{tpu_custom_call.1} parent=1 // pred_fallthru
      _
    // Predicated region
    $region6: #{tpu_custom_call.1} parent=1 // pred_check
      _
    $region7: #{tpu_custom_call.1} parent=1 // pred_check_branch
      %22 = sbr.rel (0) target = $region9
    $region8: #{tpu_custom_call.1} parent=1 // pred_region
      %s24 = ssub.s32 8192, 8192
      %25 = vsyncadd [#allocation6], %s24
      %s26 = sshll.u32 [#allocation5], 4
      %s27 = int_to_ptr.vmem [resolvable:$true] %s26
      %32 = dma.hbm_to_vmem [thread:$0]  %s1, 8192, %s27, [#allocation6], 512, 512, 32
    $region9: #{tpu_custom_call.1} parent=1 // pred_fallthru
      _
    // Predicated region
    $region10: #{tpu_custom_call.1} parent=1 // pred_check
      _
    $region11: #{tpu_custom_call.1} parent=1 // pred_check_branch
      %34 = sbr.rel (0) target = $region13
    $region12: #{tpu_custom_call.1} parent=1 // pred_region
      %s36 = ssub.s32 64, 64
      %37 = vsyncadd [#allocation6], %s36
      %s39 = sshll.u32 [#allocation7], 4
      %s40 = int_to_ptr.vmem [resolvable:$true] %s39
      %42 = dma.hbm_to_vmem [thread:$0]  %s2, 64, %s40, [#allocation6]
    $region13: #{tpu_custom_call.1} parent=1 // pred_fallthru
      _
    // Predicated region
    $region14: #{tpu_custom_call.1} parent=1 // pred_check
      _
    $region15: #{tpu_custom_call.1} parent=1 // pred_check_branch
      %44 = sbr.rel (0) target = $region17
    $region16: #{tpu_custom_call.1} parent=1 // pred_region
      %45 = dma.done [#allocation3], 128
    $region17: #{tpu_custom_call.1} parent=1 // pred_fallthru
      _
    // Predicated region
    $region18: #{tpu_custom_call.1} parent=1 // pred_check
      _
    $region19: #{tpu_custom_call.1} parent=1 // pred_check_branch
      %47 = sbr.rel (0) target = $region21
    $region20: #{tpu_custom_call.1} parent=1 // pred_region
      %48 = dma.done [#allocation6], 8192
    $region21: #{tpu_custom_call.1} parent=1 // pred_fallthru
      _
    // Predicated region
    $region22: #{tpu_custom_call.1} parent=1 // pred_check
      _
    $region23: #{tpu_custom_call.1} parent=1 // pred_check_branch
      %50 = sbr.rel (0) target = $region25
    $region24: #{tpu_custom_call.1} parent=1 // pred_region
      %51 = dma.done [#allocation6], 64
    $region25: #{tpu_custom_call.1} parent=1 // pred_fallthru
      _
    %v52 = vld [vmem:[#allocation2] sm:$0xff]
    %v53 = vld [vmem:[#allocation5] sm:$0xff]
    %v54 = vld [vmem:[#allocation5 + $0x8] sm:$0xff]
    %v55 = vld [vmem:[#allocation5 + $0x10] sm:$0xff]
    %v56 = vld [vmem:[#allocation5 + $0x18] sm:$0xff]
    %v57 = vld [vmem:[#allocation5 + $0x20] sm:$0xff]
    %v58 = vld [vmem:[#allocation5 + $0x28] sm:$0xff]
    %v59 = vld [vmem:[#allocation5 + $0x30] sm:$0xff]
    %v60 = vld [vmem:[#allocation5 + $0x38] sm:$0xff]
    %v61 = vld [vmem:[#allocation5 + $0x40] sm:$0xff]
    %v62 = vld [vmem:[#allocation5 + $0x48] sm:$0xff]
    %v63 = vld [vmem:[#allocation5 + $0x50] sm:$0xff]
    %v64 = vld [vmem:[#allocation5 + $0x58] sm:$0xff]
    %v65 = vld [vmem:[#allocation5 + $0x60] sm:$0xff]
    %v66 = vld [vmem:[#allocation5 + $0x68] sm:$0xff]
    %v67 = vld [vmem:[#allocation5 + $0x70] sm:$0xff]
    %v68 = vld [vmem:[#allocation5 + $0x78] sm:$0xff]
    %v69 = vld [vmem:[#allocation5 + $0x80] sm:$0xff]
    %v70 = vld [vmem:[#allocation5 + $0x88] sm:$0xff]
    %v71 = vld [vmem:[#allocation5 + $0x90] sm:$0xff]
    %v72 = vld [vmem:[#allocation5 + $0x98] sm:$0xff]
    %v73 = vld [vmem:[#allocation5 + $0xa0] sm:$0xff]
    %v74 = vld [vmem:[#allocation5 + $0xa8] sm:$0xff]
    %v75 = vld [vmem:[#allocation5 + $0xb0] sm:$0xff]
    %v76 = vld [vmem:[#allocation5 + $0xb8] sm:$0xff]
    %v77 = vld [vmem:[#allocation5 + $0xc0] sm:$0xff]
    %v78 = vld [vmem:[#allocation5 + $0xc8] sm:$0xff]
    %v79 = vld [vmem:[#allocation5 + $0xd0] sm:$0xff]
    %v80 = vld [vmem:[#allocation5 + $0xd8] sm:$0xff]
    %v81 = vld [vmem:[#allocation5 + $0xe0] sm:$0xff]
    %v82 = vld [vmem:[#allocation5 + $0xe8] sm:$0xff]
    %v83 = vld [vmem:[#allocation5 + $0xf0] sm:$0xff]
    %v84 = vld [vmem:[#allocation5 + $0xf8] sm:$0xff]
    %v85 = vld [vmem:[#allocation5 + $0x100] sm:$0xff]
    %v86 = vld [vmem:[#allocation5 + $0x108] sm:$0xff]
    %v87 = vld [vmem:[#allocation5 + $0x110] sm:$0xff]
    %v88 = vld [vmem:[#allocation5 + $0x118] sm:$0xff]
    %v89 = vld [vmem:[#allocation5 + $0x120] sm:$0xff]
    %v90 = vld [vmem:[#allocation5 + $0x128] sm:$0xff]
    %v91 = vld [vmem:[#allocation5 + $0x130] sm:$0xff]
    %v92 = vld [vmem:[#allocation5 + $0x138] sm:$0xff]
    %v93 = vld [vmem:[#allocation5 + $0x140] sm:$0xff]
    %v94 = vld [vmem:[#allocation5 + $0x148] sm:$0xff]
    %v95 = vld [vmem:[#allocation5 + $0x150] sm:$0xff]
    %v96 = vld [vmem:[#allocation5 + $0x158] sm:$0xff]
    %v97 = vld [vmem:[#allocation5 + $0x160] sm:$0xff]
    %v98 = vld [vmem:[#allocation5 + $0x168] sm:$0xff]
    %v99 = vld [vmem:[#allocation5 + $0x170] sm:$0xff]
    %v100 = vld [vmem:[#allocation5 + $0x178] sm:$0xff]
    %v101 = vld [vmem:[#allocation5 + $0x180] sm:$0xff]
    %v102 = vld [vmem:[#allocation5 + $0x188] sm:$0xff]
    %v103 = vld [vmem:[#allocation5 + $0x190] sm:$0xff]
    %v104 = vld [vmem:[#allocation5 + $0x198] sm:$0xff]
    %v105 = vld [vmem:[#allocation5 + $0x1a0] sm:$0xff]
    %v106 = vld [vmem:[#allocation5 + $0x1a8] sm:$0xff]
    %v107 = vld [vmem:[#allocation5 + $0x1b0] sm:$0xff]
    %v108 = vld [vmem:[#allocation5 + $0x1b8] sm:$0xff]
    %v109 = vld [vmem:[#allocation5 + $0x1c0] sm:$0xff]
    %v110 = vld [vmem:[#allocation5 + $0x1c8] sm:$0xff]
    %v111 = vld [vmem:[#allocation5 + $0x1d0] sm:$0xff]
    %v112 = vld [vmem:[#allocation5 + $0x1d8] sm:$0xff]
    %v113 = vld [vmem:[#allocation5 + $0x1e0] sm:$0xff]
    %v114 = vld [vmem:[#allocation5 + $0x1e8] sm:$0xff]
    %v115 = vld [vmem:[#allocation5 + $0x1f0] sm:$0xff]
    %v116 = vld [vmem:[#allocation5 + $0x1f8] sm:$0xff]
    %v117 = vld [vmem:[#allocation7] sm:$0xf]
    %v119 = vlaneseq
    %v120 = vshrl.u32 %v119, 7
    %v121 = vsub.s32 0, %v120
    %v122 = vrot.slane %v117, %v121
    %v123 = vlaneseq
    %v124 = vshrl.u32 %v123, 7
    %v125 = vsub.s32 1, %v124
    %v126 = vrot.slane %v117, %v125
    %v127 = vlaneseq
    %v128 = vshrl.u32 %v127, 7
    %v129 = vsub.s32 2, %v128
    %v130 = vrot.slane %v117, %v129
    %v131 = vlaneseq
    %v132 = vshrl.u32 %v131, 7
    %v133 = vsub.s32 3, %v132
    %v134 = vrot.slane %v117, %v133
    %139 = vmatprep.subr.mxu0 %v114
    %140 = vmatpush1.msra.mxu0 %v113
    %141 = vmatprep.subr.mxu0 %v110
    %142 = vmatpush1.msra.mxu0 %v109
    %143 = vmatprep.subr.mxu0 %v106
    %144 = vmatpush1.msra.mxu0 %v105
    %145 = vmatprep.subr.mxu0 %v102
    %146 = vmatpush1.msra.mxu0 %v101
    %147 = vmatprep.subr.mxu0 %v98
    %148 = vmatpush1.msra.mxu0 %v97
    %149 = vmatprep.subr.mxu0 %v94
    %150 = vmatpush1.msra.mxu0 %v93
    %151 = vmatprep.subr.mxu0 %v90
    %152 = vmatpush1.msra.mxu0 %v89
    %153 = vmatprep.subr.mxu0 %v86
    %154 = vmatpush1.msra.mxu0 %v85
    %155 = vmatprep.subr.mxu0 %v82
    %156 = vmatpush1.msra.mxu0 %v81
    %157 = vmatprep.subr.mxu0 %v78
    %158 = vmatpush1.msra.mxu0 %v77
    %159 = vmatprep.subr.mxu0 %v74
    %160 = vmatpush1.msra.mxu0 %v73
    %161 = vmatprep.subr.mxu0 %v70
    %162 = vmatpush1.msra.mxu0 %v69
    %163 = vmatprep.subr.mxu0 %v66
    %164 = vmatpush1.msra.mxu0 %v65
    %165 = vmatprep.subr.mxu0 %v62
    %166 = vmatpush1.msra.mxu0 %v61
    %167 = vmatprep.subr.mxu0 %v58
    %168 = vmatpush1.msra.mxu0 %v57
    %169 = vmatprep.subr.mxu0 %v54
    %170 = vmatpush1.msra.mxu0 %v53
    %171 = vmatprep.subr.mxu0 0.0
    %172 = vmatpush2.msra.mxu0 0.0
    %173 = vmatprep.subr.mxu0 0.0
    %174 = vmatpush2.msra.mxu0 0.0
    %175 = vmatprep.subr.mxu0 0.0
    %176 = vmatpush2.msra.mxu0 0.0
    %177 = vmatprep.subr.mxu0 0.0
    %178 = vmatpush2.msra.mxu0 0.0
    %179 = vmatprep.subr.mxu0 0.0
    %180 = vmatpush2.msra.mxu0 0.0
    %181 = vmatprep.subr.mxu0 0.0
    %182 = vmatpush2.msra.mxu0 0.0
    %183 = vmatprep.subr.mxu0 0.0
    %184 = vmatpush2.msra.mxu0 0.0
    %185 = vmatprep.subr.mxu0 0.0
    %186 = vmatpush2.msra.mxu0 0.0
    %187 = vmatprep.subr.mxu0 0.0
    %188 = vmatpush2.msra.mxu0 0.0
    %189 = vmatprep.subr.mxu0 0.0
    %190 = vmatpush2.msra.mxu0 0.0
    %191 = vmatprep.subr.mxu0 0.0
    %192 = vmatpush2.msra.mxu0 0.0
    %193 = vmatprep.subr.mxu0 0.0
    %194 = vmatpush2.msra.mxu0 0.0
    %195 = vmatprep.subr.mxu0 0.0
    %196 = vmatpush2.msra.mxu0 0.0
    %197 = vmatprep.subr.mxu0 0.0
    %198 = vmatpush2.msra.mxu0 0.0
    %199 = vmatprep.subr.mxu0 0.0
    %200 = vmatpush2.msra.mxu0 0.0
    %201 = vmatprep.subr.mxu0 0.0
    %202 = vmatpush2.msra.mxu0 0.0
    %203 = vmatprep.mubr.f32.mxu0 0.0
    %204 = vmatmul.mubr.f32.gmra.mxu0 %v52
    %v205 = vpop.f32.mrf.mxu0
    %v206 = vadd.f32 %v122, %v205
    %v207 = vpop.f32.mrf.mxu0
    %v208 = vadd.f32 %v126, %v207
    %209 = vdwg.mxu0
    %210 = vmatprep.subr.mxu0 %v116
    %211 = vmatpush1.msra.mxu0 %v115
    %212 = vmatprep.subr.mxu0 %v112
    %213 = vmatpush1.msra.mxu0 %v111
    %214 = vmatprep.subr.mxu0 %v108
    %215 = vmatpush1.msra.mxu0 %v107
    %216 = vmatprep.subr.mxu0 %v104
    %217 = vmatpush1.msra.mxu0 %v103
    %218 = vmatprep.subr.mxu0 %v100
    %219 = vmatpush1.msra.mxu0 %v99
    %220 = vmatprep.subr.mxu0 %v96
    %221 = vmatpush1.msra.mxu0 %v95
    %222 = vmatprep.subr.mxu0 %v92
    %223 = vmatpush1.msra.mxu0 %v91
    %224 = vmatprep.subr.mxu0 %v88
    %225 = vmatpush1.msra.mxu0 %v87
    %226 = vmatprep.subr.mxu0 %v84
    %227 = vmatpush1.msra.mxu0 %v83
    %228 = vmatprep.subr.mxu0 %v80
    %229 = vmatpush1.msra.mxu0 %v79
    %230 = vmatprep.subr.mxu0 %v76
    %231 = vmatpush1.msra.mxu0 %v75
    %232 = vmatprep.subr.mxu0 %v72
    %233 = vmatpush1.msra.mxu0 %v71
    %234 = vmatprep.subr.mxu0 %v68
    %235 = vmatpush1.msra.mxu0 %v67
    %236 = vmatprep.subr.mxu0 %v64
    %237 = vmatpush1.msra.mxu0 %v63
    %238 = vmatprep.subr.mxu0 %v60
    %239 = vmatpush1.msra.mxu0 %v59
    %240 = vmatprep.subr.mxu0 %v56
    %241 = vmatpush1.msra.mxu0 %v55
    %242 = vmatprep.subr.mxu0 0.0
    %243 = vmatpush2.msra.mxu0 0.0
    %244 = vmatprep.subr.mxu0 0.0
    %245 = vmatpush2.msra.mxu0 0.0
    %246 = vmatprep.subr.mxu0 0.0
    %247 = vmatpush2.msra.mxu0 0.0
    %248 = vmatprep.subr.mxu0 0.0
    %249 = vmatpush2.msra.mxu0 0.0
    %250 = vmatprep.subr.mxu0 0.0
    %251 = vmatpush2.msra.mxu0 0.0
    %252 = vmatprep.subr.mxu0 0.0
    %253 = vmatpush2.msra.mxu0 0.0
    %254 = vmatprep.subr.mxu0 0.0
    %255 = vmatpush2.msra.mxu0 0.0
    %256 = vmatprep.subr.mxu0 0.0
    %257 = vmatpush2.msra.mxu0 0.0
    %258 = vmatprep.subr.mxu0 0.0
    %259 = vmatpush2.msra.mxu0 0.0
    %260 = vmatprep.subr.mxu0 0.0
    %261 = vmatpush2.msra.mxu0 0.0
    %262 = vmatprep.subr.mxu0 0.0
    %263 = vmatpush2.msra.mxu0 0.0
    %264 = vmatprep.subr.mxu0 0.0
    %265 = vmatpush2.msra.mxu0 0.0
    %266 = vmatprep.subr.mxu0 0.0
    %267 = vmatpush2.msra.mxu0 0.0
    %268 = vmatprep.subr.mxu0 0.0
    %269 = vmatpush2.msra.mxu0 0.0
    %270 = vmatprep.subr.mxu0 0.0
    %271 = vmatpush2.msra.mxu0 0.0
    %272 = vmatprep.subr.mxu0 0.0
    %273 = vmatpush2.msra.mxu0 0.0
    %274 = vmatprep.mubr.f32.mxu0 0.0
    %275 = vmatmul.mubr.f32.gmra.mxu0 %v52
    %v276 = vpop.f32.mrf.mxu0
    %v277 = vadd.f32 %v130, %v276
    %v278 = vpop.f32.mrf.mxu0
    %v279 = vadd.f32 %v134, %v278
    %280 = vdwg.mxu0
    %281 = vst [vmem:[#allocation8] sm:$0xff] %v206
    %282 = vst [vmem:[#allocation8 + $0x8] sm:$0xff] %v208
    %283 = vst [vmem:[#allocation8 + $0x10] sm:$0xff] %v277
    %284 = vst [vmem:[#allocation8 + $0x18] sm:$0xff] %v279
    // Predicated region
    $region26: #{tpu_custom_call.1} parent=1 // pred_check
      _
    $region27: #{tpu_custom_call.1} parent=1 // pred_check_branch
      %286 = sbr.rel (0) target = $region29
    $region28: #{tpu_custom_call.1} parent=1 // pred_region
      %s288 = ssub.s32 512, 512
      %289 = vsyncadd [#allocation4], %s288
      %s291 = sshll.u32 [#allocation8], 4
      %s292 = int_to_ptr.vmem [resolvable:$true] %s291
      %294 = dma.vmem_to_hbm [thread:$0]  %s292, 512, %s3, [#allocation4]
    $region29: #{tpu_custom_call.1} parent=1 // pred_fallthru
      _
    // Predicated region
    $region30: #{tpu_custom_call.1} parent=1 // pred_check
      _
    $region31: #{tpu_custom_call.1} parent=1 // pred_check_branch
      %296 = sbr.rel (0) target = $region33
    $region32: #{tpu_custom_call.1} parent=1 // pred_region
      %297 = dma.done [#allocation4], 512
    $region33: #{tpu_custom_call.1} parent=1 // pred_fallthru
      _
    %298 = vsyncpa [#allocation3], 1
    %299 = vsyncpa [#allocation6], 1
    %300 = vsyncpa [#allocation4], 1

</llo_original>
